<compile_context>
chip_gen: v7x
topology: tpu7x:2x2x1
jax: 0.10.0
libtpu: 0.0.40
codegen_flags: <defaults>
</compile_context>

<pallas_src>
from functools import partial

import jax
import jax.numpy as jnp
from jax.experimental import pallas as pl
from jax.experimental.pallas import tpu as pltpu

LANE = 128      # TPU lane width; feature dims padded to this
TILE_B = 256    # batch tile: fills 256-wide MXU on v6e/v7x, amortizes per-step overhead


def _round_up(n, m):
    return ((n + m - 1) // m) * m


def _epilogue_dtype_for_device():
    """bf16 ReLU/bias epilogue on v6e/v7x (bf16 VPU); f32 on v5e and older."""
    try:
        kind = jax.devices()[0].device_kind.lower()
    except Exception:
        return jnp.float32
    for old in ("v2", "v3", "v4", "v5"):
        if old in kind:
            return jnp.float32
    return jnp.bfloat16


# ----------------------------------------------------------------------------
# Fused kernel: the entire L+1 layer stack for one batch tile.
#   refs = (x, W_0..W_{n_layers-1}, b_stacked, out)
#     x         : [TILE_B, d_in_pad]        f32  (cast to bf16 in-kernel)
#     W_n       : [dims[n], dims[n+1]]      bf16 (alphas pre-folded)
#     b_stacked : [n_layers-1, r_pad]       f32  (bias_alpha pre-folded)
# ----------------------------------------------------------------------------
def _pinet_fused_kernel(*refs, n_layers, epilogue_dtype):
    x_ref = refs[0]
    w_refs = refs[1:1 + n_layers]
    b_ref = refs[1 + n_layers]
    o_ref = refs[-1]

    b_all = b_ref[...].astype(epilogue_dtype)        # tiny; loaded once per tile
    h = x_ref[...].astype(jnp.bfloat16)              # f32 -> bf16 here (no extra HBM copy)
    for n in range(n_layers):                        # static unroll (L is small)
        if n > 0:
            h = jnp.maximum(h, 0.0)                  # ReLU (VPU; bf16 on v6e/v7x)
        y = jnp.dot(h.astype(jnp.bfloat16), w_refs[n][...],
                    preferred_element_type=jnp.float32)   # MXU, f32 accumulate
        if n < n_layers - 1:
            y = y.astype(epilogue_dtype) + b_all[n:n + 1, :]   # bias pre-alpha-scaled
        h = y
    o_ref[...] = h.astype(o_ref.dtype)


def _vmem_limit_bytes(weights, b_stack, tile_b, d_in_pad, d_out_pad, r_pad):
    w_bytes = sum(int(w.size) * w.dtype.itemsize for w in weights)    # single-buffered
    b_bytes = int(b_stack.size) * b_stack.dtype.itemsize              # single-buffered
    io_bytes = 2 * tile_b * (d_in_pad + d_out_pad) * 4                # double-buffered x/out tiles
    act_bytes = 4 * tile_b * max(d_in_pad, r_pad, d_out_pad) * 4      # carried activations / epilogue
    total = w_bytes + b_bytes + io_bytes + act_bytes
    return int(min(max(int(total * 1.25), 4 << 20), 96 << 20))        # +25% headroom, clamped


def _pinet_pallas_call(x_pad, weights, b_stack, tile_b, epilogue_dtype):
    n_layers = len(weights)
    B_pad, d_in_pad = x_pad.shape
    d_out_pad = weights[-1].shape[1]
    r_pad = weights[0].shape[1]
    grid = (B_pad // tile_b,)

    # Constant-index blocks (weights/biases) never change across grid steps:
    # single-buffer them so the whole parameter set costs 1x VMEM, not 2x.
    resident = pl.Buffered(1)
    in_specs = [pl.BlockSpec((tile_b, d_in_pad), lambda i: (i, 0))]
    in_specs += [pl.BlockSpec(w.shape, lambda i: (0, 0), pipeline_mode=resident)
                 for w in weights]
    in_specs += [pl.BlockSpec(b_stack.shape, lambda i: (0, 0), pipeline_mode=resident)]
    out_spec = pl.BlockSpec((tile_b, d_out_pad), lambda i: (i, 0))

    flops = 2 * B_pad * sum(w.shape[0] * w.shape[1] for w in weights)
    bytes_accessed = (x_pad.size * x_pad.dtype.itemsize
                      + sum(int(w.size) * w.dtype.itemsize for w in weights)
                      + int(b_stack.size) * b_stack.dtype.itemsize
                      + B_pad * d_out_pad * 4)

    return pl.pallas_call(
        partial(_pinet_fused_kernel, n_layers=n_layers, epilogue_dtype=epilogue_dtype),
        out_shape=jax.ShapeDtypeStruct((B_pad, d_out_pad), jnp.float32),
        grid_spec=pltpu.PrefetchScalarGridSpec(
            num_scalar_prefetch=0,
            grid=grid,
            in_specs=in_specs,
            out_specs=out_spec,
        ),
        compiler_params=pltpu.CompilerParams(
            dimension_semantics=("parallel",),          # batch axis -> 2 TCs on v7x
            vmem_limit_bytes=_vmem_limit_bytes(
                weights, b_stack, tile_b, d_in_pad, d_out_pad, r_pad)),
        cost_estimate=pl.CostEstimate(
            flops=flops, transcendentals=0, bytes_accessed=bytes_accessed),
    )(x_pad, *weights, b_stack)


@partial(jax.jit, static_argnames=("d_in", "d_out", "tile_b", "epilogue_dtype"))
def pinet_forward(x, weights, b_stack, *, d_in, d_out, tile_b, epilogue_dtype):
    """x: [B, d_in] f32 -> [B, d_out] f32 via the fused Pallas kernel."""
    B = x.shape[0]
    d_in_pad = weights[0].shape[0]
    B_pad = pl.cdiv(B, tile_b) * tile_b
    # Pad only when actually needed; x stays f32 and the bf16 cast is fused
    # into the kernel (no extra padded/cast HBM copy of x per forward).
    if B_pad != B or d_in_pad != d_in:
        x = jnp.pad(x, ((0, B_pad - B), (0, d_in_pad - d_in)))
    out_pad = _pinet_pallas_call(x, weights, b_stack, tile_b, epilogue_dtype)
    return out_pad[:B, :d_out]


# ----------------------------------------------------------------------------
# PiNetwork wrapper: parameter construction, alpha folding, padding, stacking.
# ----------------------------------------------------------------------------
class PiNetworkPallas:
    def __init__(self, d_in, d_out, r, L,
                 first_layer_alpha=1.0, last_layer_alpha=1.0,
                 bias_alpha=1.0, last_bias_alpha=None,
                 layernorm=False, tile_b=TILE_B, key=None):
        assert not layernorm, "layernorm branch not implemented (see TODO)"
        self.d_in, self.d_out, self.r, self.L = d_in, d_out, r, L
        self.tile_b = tile_b
        self.epilogue_dtype = _epilogue_dtype_for_device()
        first_layer_alpha = float(first_layer_alpha)
        last_layer_alpha = float(last_layer_alpha)
        bias_alpha = float(bias_alpha)
        # last_bias_alpha is unused: the readout nn.Linear has bias=False.

        key = jax.random.PRNGKey(0) if key is None else key
        ks = jax.random.split(key, 2 * L + 1)

        d_in_p = _round_up(d_in, LANE)
        r_p = _round_up(r, LANE)
        d_out_p = _round_up(d_out, LANE)
        self.d_in_pad, self.r_pad, self.d_out_pad = d_in_p, r_p, d_out_p

        # Raw f32 parameters (finite-width linear+ReLU stand-in for InfPi layers).
        w_raw = [jax.random.normal(ks[0], (d_in, r), jnp.float32) / jnp.sqrt(d_in)]
        b_raw = [jax.random.normal(ks[1], (1, r), jnp.float32) * 0.1]
        for n in range(1, L):
            w_raw.append(jax.random.normal(ks[2 * n], (r, r), jnp.float32) / jnp.sqrt(r))
            b_raw.append(jax.random.normal(ks[2 * n + 1], (1, r), jnp.float32) * 0.1)
        w_raw.append(jax.random.normal(ks[2 * L], (r, d_out), jnp.float32) / jnp.sqrt(r))

        # Fold alpha scalars into the parameters (once, at init):
        #   W0  *= first_layer_alpha ; b0 *= bias_alpha * first_layer_alpha
        #   bn  *= bias_alpha (n = 1..L-1) ; Wlast *= last_layer_alpha (no bias)
        w_fold = list(w_raw)
        b_fold = list(b_raw)
        w_fold[0] = w_fold[0] * first_layer_alpha
        b_fold[0] = b_fold[0] * (bias_alpha * first_layer_alpha)
        for n in range(1, L):
            b_fold[n] = b_fold[n] * bias_alpha
        w_fold[-1] = w_fold[-1] * last_layer_alpha

        # Zero-pad to lane-aligned shapes; weights -> bf16 (f32 MXU accumulate),
        # biases stacked into one (L, r_pad) f32 array.  Zero padding is exact.
        def pad2(a, rows, cols):
            return jnp.zeros((rows, cols), a.dtype).at[:a.shape[0], :a.shape[1]].set(a)

        dims = [d_in_p] + [r_p] * L + [d_out_p]
        self.w_pad = tuple(
            pad2(w, dims[n], dims[n + 1]).astype(jnp.bfloat16)
            for n, w in enumerate(w_fold))
        self.b_stack = jnp.concatenate([pad2(b, 1, r_p) for b in b_fold], axis=0)

    def forward(self, x):
        return pinet_forward(x, self.w_pad, self.b_stack,
                             d_in=self.d_in, d_out=self.d_out,
                             tile_b=self.tile_b, epilogue_dtype=self.epilogue_dtype)

    # Pure-JAX reference mirroring the kernel's bf16-matmul / f32-accumulate math.
    def forward_ref(self, x):
        B = x.shape[0]
        xp = jnp.zeros((B, self.d_in_pad), jnp.float32).at[:, :self.d_in].set(x)
        h = xp.astype(jnp.bfloat16)
        n_layers = len(self.w_pad)
        b_all = self.b_stack.astype(self.epilogue_dtype)
        for n in range(n_layers):
            if n > 0:
                h = jnp.maximum(h, 0.0)
            y = jnp.dot(h.astype(jnp.bfloat16), self.w_pad[n],
                        preferred_element_type=jnp.float32)
            if n < n_layers - 1:
                y = y.astype(self.epilogue_dtype) + b_all[n:n + 1, :]
            h = y
        return h[:, :self.d_out]


if __name__ == "__main__":
    key = jax.random.PRNGKey(0)
    k_param, k_x = jax.random.split(key)

    # Small, forward-consistent demo shapes (overhead-bound; tune at real r/B).
    B, d_in, r, d_out, L = 8, 128, 64, 10, 3

    net = PiNetworkPallas(d_in=d_in, d_out=d_out, r=r, L=L,
                          first_layer_alpha=1.0, last_layer_alpha=0.5,
                          bias_alpha=0.5, key=k_param)

    x = jax.random.normal(k_x, (B, d_in), jnp.float32)

    out = jax.block_until_ready(net.forward(x))
    ref = net.forward_ref(x)

    assert out.shape == (B, d_out)
    assert jnp.allclose(out, ref, atol=1e-2, rtol=1e-2), "mismatch vs JAX reference"

    print("KERNEL_OK")
</pallas_src>

<mosaic_0001>
module attributes {stable_mosaic.version = 11 : i64} {
  func.func @_pinet_fused_kernel(%arg0: i32, %arg1: memref<256x128xf32, #tpu.memory_space<vmem>>, %arg2: memref<128x128xbf16, #tpu.memory_space<vmem>>, %arg3: memref<128x128xbf16, #tpu.memory_space<vmem>>, %arg4: memref<128x128xbf16, #tpu.memory_space<vmem>>, %arg5: memref<128x128xbf16, #tpu.memory_space<vmem>>, %arg6: memref<3x128xf32, #tpu.memory_space<vmem>>, %arg7: memref<256x128xf32, #tpu.memory_space<vmem>>) attributes {dimension_semantics = [#tpu.dimension_semantics<parallel>], iteration_bounds = array<i64: 1>, scalar_prefetch = 0 : i64, scratch_operands = 0 : i64, tpu.core_type = #tpu.core_type<tc>, window_params = [{transform_indices = @transform_0, window_bounds = array<i64: 256, 128>}, {pipeline_mode = #tpu.pipeline_mode<synchronous>, transform_indices = @transform_1, window_bounds = array<i64: 128, 128>}, {pipeline_mode = #tpu.pipeline_mode<synchronous>, transform_indices = @transform_2, window_bounds = array<i64: 128, 128>}, {pipeline_mode = #tpu.pipeline_mode<synchronous>, transform_indices = @transform_3, window_bounds = array<i64: 128, 128>}, {pipeline_mode = #tpu.pipeline_mode<synchronous>, transform_indices = @transform_4, window_bounds = array<i64: 128, 128>}, {pipeline_mode = #tpu.pipeline_mode<synchronous>, transform_indices = @transform_5, window_bounds = array<i64: 3, 128>}, {transform_indices = @transform_6, window_bounds = array<i64: 256, 128>}]} {
    %c0 = arith.constant 0 : index
    %c0_0 = arith.constant 0 : index
    %0 = vector.load %arg6[%c0, %c0_0] : memref<3x128xf32, #tpu.memory_space<vmem>>, vector<3x128xf32>
    %1 = arith.truncf %0 : vector<3x128xf32> to vector<3x128xbf16>
    %c0_1 = arith.constant 0 : index
    %c0_2 = arith.constant 0 : index
    %2 = vector.load %arg1[%c0_1, %c0_2] : memref<256x128xf32, #tpu.memory_space<vmem>>, vector<256x128xf32>
    %3 = arith.truncf %2 : vector<256x128xf32> to vector<256x128xbf16>
    %c0_3 = arith.constant 0 : index
    %c0_4 = arith.constant 0 : index
    %4 = vector.load %arg2[%c0_3, %c0_4] : memref<128x128xbf16, #tpu.memory_space<vmem>>, vector<128x128xbf16>
    %cst = arith.constant dense<0.000000e+00> : vector<256x128xf32>
    %5 = tpu.matmul %3, %4, %cst {dimension_numbers = #tpu.dot_dimension_numbers<[1], [0], [0], [1], [0, 0, 1, 1], [], []>} : vector<256x128xbf16>, vector<128x128xbf16>, vector<256x128xf32> -> vector<256x128xf32>
    %6 = arith.truncf %5 : vector<256x128xf32> to vector<256x128xbf16>
    %7 = vector.extract_strided_slice %1 {offsets = [0, 0], sizes = [1, 128], strides = [1, 1]} : vector<3x128xbf16> to vector<1x128xbf16>
    %8 = vector.broadcast %7 : vector<1x128xbf16> to vector<256x128xbf16>
    %9 = arith.addf %6, %8 : vector<256x128xbf16>
    %cst_5 = arith.constant 0.000000e+00 : bf16
    %10 = vector.broadcast %cst_5 : bf16 to vector<256x128xbf16>
    %11 = arith.maximumf %9, %10 : vector<256x128xbf16>
    %c0_6 = arith.constant 0 : index
    %c0_7 = arith.constant 0 : index
    %12 = vector.load %arg3[%c0_6, %c0_7] : memref<128x128xbf16, #tpu.memory_space<vmem>>, vector<128x128xbf16>
    %cst_8 = arith.constant dense<0.000000e+00> : vector<256x128xf32>
    %13 = tpu.matmul %11, %12, %cst_8 {dimension_numbers = #tpu.dot_dimension_numbers<[1], [0], [0], [1], [0, 0, 1, 1], [], []>} : vector<256x128xbf16>, vector<128x128xbf16>, vector<256x128xf32> -> vector<256x128xf32>
    %14 = arith.truncf %13 : vector<256x128xf32> to vector<256x128xbf16>
    %15 = vector.extract_strided_slice %1 {offsets = [1, 0], sizes = [1, 128], strides = [1, 1]} : vector<3x128xbf16> to vector<1x128xbf16>
    %16 = vector.broadcast %15 : vector<1x128xbf16> to vector<256x128xbf16>
    %17 = arith.addf %14, %16 : vector<256x128xbf16>
    %cst_9 = arith.constant 0.000000e+00 : bf16
    %18 = vector.broadcast %cst_9 : bf16 to vector<256x128xbf16>
    %19 = arith.maximumf %17, %18 : vector<256x128xbf16>
    %c0_10 = arith.constant 0 : index
    %c0_11 = arith.constant 0 : index
    %20 = vector.load %arg4[%c0_10, %c0_11] : memref<128x128xbf16, #tpu.memory_space<vmem>>, vector<128x128xbf16>
    %cst_12 = arith.constant dense<0.000000e+00> : vector<256x128xf32>
    %21 = tpu.matmul %19, %20, %cst_12 {dimension_numbers = #tpu.dot_dimension_numbers<[1], [0], [0], [1], [0, 0, 1, 1], [], []>} : vector<256x128xbf16>, vector<128x128xbf16>, vector<256x128xf32> -> vector<256x128xf32>
    %22 = arith.truncf %21 : vector<256x128xf32> to vector<256x128xbf16>
    %23 = vector.extract_strided_slice %1 {offsets = [2, 0], sizes = [1, 128], strides = [1, 1]} : vector<3x128xbf16> to vector<1x128xbf16>
    %24 = vector.broadcast %23 : vector<1x128xbf16> to vector<256x128xbf16>
    %25 = arith.addf %22, %24 : vector<256x128xbf16>
    %cst_13 = arith.constant 0.000000e+00 : bf16
    %26 = vector.broadcast %cst_13 : bf16 to vector<256x128xbf16>
    %27 = arith.maximumf %25, %26 : vector<256x128xbf16>
    %c0_14 = arith.constant 0 : index
    %c0_15 = arith.constant 0 : index
    %28 = vector.load %arg5[%c0_14, %c0_15] : memref<128x128xbf16, #tpu.memory_space<vmem>>, vector<128x128xbf16>
    %cst_16 = arith.constant dense<0.000000e+00> : vector<256x128xf32>
    %29 = tpu.matmul %27, %28, %cst_16 {dimension_numbers = #tpu.dot_dimension_numbers<[1], [0], [0], [1], [0, 0, 1, 1], [], []>} : vector<256x128xbf16>, vector<128x128xbf16>, vector<256x128xf32> -> vector<256x128xf32>
    %c0_17 = arith.constant 0 : index
    %c0_18 = arith.constant 0 : index
    %30 = vector.load %arg7[%c0_17, %c0_18] : memref<256x128xf32, #tpu.memory_space<vmem>>, vector<256x128xf32>
    tpu.vector_store %arg7[%c0_17, %c0_18], %29 {strides = array<i32>} : memref<256x128xf32, #tpu.memory_space<vmem>>, vector<256x128xf32>,
    return
  }
  func.func @transform_0(%arg0: i32) -> (i32, i32) {
    %c0_i32 = arith.constant 0 : i32
    %c0_i32_0 = arith.constant 0 : i32
    return %arg0, %c0_i32 : i32, i32
  }
  func.func @transform_1(%arg0: i32) -> (i32, i32) {
    %c0_i32 = arith.constant 0 : i32
    %c0_i32_0 = arith.constant 0 : i32
    %c0_i32_1 = arith.constant 0 : i32
    return %c0_i32, %c0_i32_0 : i32, i32
  }
  func.func @transform_2(%arg0: i32) -> (i32, i32) {
    %c0_i32 = arith.constant 0 : i32
    %c0_i32_0 = arith.constant 0 : i32
    %c0_i32_1 = arith.constant 0 : i32
    return %c0_i32, %c0_i32_0 : i32, i32
  }
  func.func @transform_3(%arg0: i32) -> (i32, i32) {
    %c0_i32 = arith.constant 0 : i32
    %c0_i32_0 = arith.constant 0 : i32
    %c0_i32_1 = arith.constant 0 : i32
    return %c0_i32, %c0_i32_0 : i32, i32
  }
  func.func @transform_4(%arg0: i32) -> (i32, i32) {
    %c0_i32 = arith.constant 0 : i32
    %c0_i32_0 = arith.constant 0 : i32
    %c0_i32_1 = arith.constant 0 : i32
    return %c0_i32, %c0_i32_0 : i32, i32
  }
  func.func @transform_5(%arg0: i32) -> (i32, i32) {
    %c0_i32 = arith.constant 0 : i32
    %c0_i32_0 = arith.constant 0 : i32
    %c0_i32_1 = arith.constant 0 : i32
    return %c0_i32, %c0_i32_0 : i32, i32
  }
  func.func @transform_6(%arg0: i32) -> (i32, i32) {
    %c0_i32 = arith.constant 0 : i32
    %c0_i32_0 = arith.constant 0 : i32
    return %arg0, %c0_i32 : i32, i32
  }
}

</mosaic_0001>

<llo_original>
// kernel: pinet_forward.1
$region0: #{pinet_forward.1}
  #allocation0 [shape = 'u32[]', space=smem, size = 0x4, offset = 0x4, fixed_abs, tag = 'smem constant byte address 0x4 - core index']
  #allocation1 [shape = 'u32[144,128]{1,0:T(1,128)}', space=vmem, size = 0x12000, scoped, tag = 'internal scratch']
  %s0 = inlined_call_operand.vmem [shape: f32[256,128], index: 0, kind: input, shape index: {}]
  %s1 = inlined_call_operand.vmem [shape: bf16[128,128], index: 1, kind: input, shape index: {}]
  %s2 = inlined_call_operand.vmem [shape: bf16[128,128], index: 2, kind: input, shape index: {}]
  %s3 = inlined_call_operand.vmem [shape: bf16[128,128], index: 3, kind: input, shape index: {}]
  %s4 = inlined_call_operand.vmem [shape: bf16[128,128], index: 4, kind: input, shape index: {}]
  %s5 = inlined_call_operand.vmem [shape: f32[3,128], index: 5, kind: input, shape index: {}]
  %s6 = inlined_call_operand.vmem [shape: f32[256,128], index: 6, kind: output, shape index: {}]
  %s7 = sld [smem:[#allocation0]]
  $region34: #{pinet_forward.1} parent=0
    _
  %s9 = ssub.s32 1, %s7
  %s10 = scalar_select 0, %s9, %s7
  // Predicated region
  $region2: #{pinet_forward.1} parent=0 // pred_check
    _
  $region3: #{pinet_forward.1} parent=0 // pred_check_branch
    %12 = sbr.rel (0) target = $region5
  $region4: #{pinet_forward.1} parent=0 // pred_region
    _
  $region5: #{pinet_forward.1} parent=0 // pred_fallthru
    _
  // Predicated region
  $region6: #{pinet_forward.1} parent=0 // pred_check
    _
  $region7: #{pinet_forward.1} parent=0 // pred_check_branch
    %14 = sbr.rel (0) target = $region9
  $region8: #{pinet_forward.1} parent=0 // pred_region
    _
  $region9: #{pinet_forward.1} parent=0 // pred_fallthru
    _
  // Predicated region
  $region10: #{pinet_forward.1} parent=0 // pred_check
    _
  $region11: #{pinet_forward.1} parent=0 // pred_check_branch
    %16 = sbr.rel (0) target = $region13
  $region12: #{pinet_forward.1} parent=0 // pred_region
    _
  $region13: #{pinet_forward.1} parent=0 // pred_fallthru
    _
  // Predicated region
  $region14: #{pinet_forward.1} parent=0 // pred_check
    _
  $region15: #{pinet_forward.1} parent=0 // pred_check_branch
    %18 = sbr.rel (0) target = $region17
  $region16: #{pinet_forward.1} parent=0 // pred_region
    _
  $region17: #{pinet_forward.1} parent=0 // pred_fallthru
    _
  // Predicated region
  $region18: #{pinet_forward.1} parent=0 // pred_check
    _
  $region19: #{pinet_forward.1} parent=0 // pred_check_branch
    %20 = sbr.rel (0) target = $region21
  $region20: #{pinet_forward.1} parent=0 // pred_region
    _
  $region21: #{pinet_forward.1} parent=0 // pred_fallthru
    _
  // Predicated region
  $region22: #{pinet_forward.1} parent=0 // pred_check
    _
  $region23: #{pinet_forward.1} parent=0 // pred_check_branch
    %22 = sbr.rel (0) target = $region25
  $region24: #{pinet_forward.1} parent=0 // pred_region
    _
  $region25: #{pinet_forward.1} parent=0 // pred_fallthru
    _
  %v24 = vld [vmem:[%s5] sm:$0x7]
  %v25 = vpack.c.bf16 %v24, %v24
  %v26 = vld [vmem:[%s0] sm:$0xff]
  %v27 = vld [vmem:[%s0 + $0x8] sm:$0xff]
  %v28 = vld [vmem:[%s0 + $0x10] sm:$0xff]
  %v29 = vld [vmem:[%s0 + $0x18] sm:$0xff]
  %v30 = vld [vmem:[%s0 + $0x20] sm:$0xff]
  %v31 = vld [vmem:[%s0 + $0x28] sm:$0xff]
  %v32 = vld [vmem:[%s0 + $0x30] sm:$0xff]
  %v33 = vld [vmem:[%s0 + $0x38] sm:$0xff]
  %v34 = vld [vmem:[%s0 + $0x40] sm:$0xff]
  %v35 = vld [vmem:[%s0 + $0x48] sm:$0xff]
  %v36 = vld [vmem:[%s0 + $0x50] sm:$0xff]
  %v37 = vld [vmem:[%s0 + $0x58] sm:$0xff]
  %v38 = vld [vmem:[%s0 + $0x60] sm:$0xff]
  %v39 = vld [vmem:[%s0 + $0x68] sm:$0xff]
  %v40 = vld [vmem:[%s0 + $0x70] sm:$0xff]
  %v41 = vld [vmem:[%s0 + $0x78] sm:$0xff]
  %v42 = vld [vmem:[%s0 + $0x80] sm:$0xff]
  %v43 = vld [vmem:[%s0 + $0x88] sm:$0xff]
  %v44 = vld [vmem:[%s0 + $0x90] sm:$0xff]
  %v45 = vld [vmem:[%s0 + $0x98] sm:$0xff]
  %v46 = vld [vmem:[%s0 + $0xa0] sm:$0xff]
  %v47 = vld [vmem:[%s0 + $0xa8] sm:$0xff]
  %v48 = vld [vmem:[%s0 + $0xb0] sm:$0xff]
  %v49 = vld [vmem:[%s0 + $0xb8] sm:$0xff]
  %v50 = vld [vmem:[%s0 + $0xc0] sm:$0xff]
  %v51 = vld [vmem:[%s0 + $0xc8] sm:$0xff]
  %v52 = vld [vmem:[%s0 + $0xd0] sm:$0xff]
  %v53 = vld [vmem:[%s0 + $0xd8] sm:$0xff]
  %v54 = vld [vmem:[%s0 + $0xe0] sm:$0xff]
  %v55 = vld [vmem:[%s0 + $0xe8] sm:$0xff]
  %v56 = vld [vmem:[%s0 + $0xf0] sm:$0xff]
  %v57 = vld [vmem:[%s0 + $0xf8] sm:$0xff]
  %v58 = vpack.c.bf16 %v27, %v26
  %v59 = vpack.c.bf16 %v29, %v28
  %v60 = vpack.c.bf16 %v31, %v30
  %v61 = vpack.c.bf16 %v33, %v32
  %v62 = vpack.c.bf16 %v35, %v34
  %v63 = vpack.c.bf16 %v37, %v36
  %v64 = vpack.c.bf16 %v39, %v38
  %v65 = vpack.c.bf16 %v41, %v40
  %v66 = vpack.c.bf16 %v43, %v42
  %v67 = vpack.c.bf16 %v45, %v44
  %v68 = vpack.c.bf16 %v47, %v46
  %v69 = vpack.c.bf16 %v49, %v48
  %v70 = vpack.c.bf16 %v51, %v50
  %v71 = vpack.c.bf16 %v53, %v52
  %v72 = vpack.c.bf16 %v55, %v54
  %v73 = vpack.c.bf16 %v57, %v56
  %v74 = vld [vmem:[%s1] sm:$0xf]
  %v75 = vld [vmem:[%s1 + $0x4] sm:$0xf]
  %v76 = vld [vmem:[%s1 + $0x8] sm:$0xf]
  %v77 = vld [vmem:[%s1 + $0xc] sm:$0xf]
  %v78 = vld [vmem:[%s1 + $0x10] sm:$0xf]
  %v79 = vld [vmem:[%s1 + $0x14] sm:$0xf]
  %v80 = vld [vmem:[%s1 + $0x18] sm:$0xf]
  %v81 = vld [vmem:[%s1 + $0x1c] sm:$0xf]
  %v82 = vld [vmem:[%s1 + $0x20] sm:$0xf]
  %v83 = vld [vmem:[%s1 + $0x24] sm:$0xf]
  %v84 = vld [vmem:[%s1 + $0x28] sm:$0xf]
  %v85 = vld [vmem:[%s1 + $0x2c] sm:$0xf]
  %v86 = vld [vmem:[%s1 + $0x30] sm:$0xf]
  %v87 = vld [vmem:[%s1 + $0x34] sm:$0xf]
  %v88 = vld [vmem:[%s1 + $0x38] sm:$0xf]
  %v89 = vld [vmem:[%s1 + $0x3c] sm:$0xf]
  %v106 = vunpack.c.l.b16 %v74
  %v107 = vunpack.c.l.b16 %v75
  %v108 = vunpack.c.l.b16 %v76
  %v109 = vunpack.c.l.b16 %v77
  %v110 = vunpack.c.l.b16 %v78
  %v111 = vunpack.c.l.b16 %v79
  %v112 = vunpack.c.l.b16 %v80
  %v113 = vunpack.c.l.b16 %v81
  %v114 = vunpack.c.l.b16 %v82
  %v115 = vunpack.c.l.b16 %v83
  %v116 = vunpack.c.l.b16 %v84
  %v117 = vunpack.c.l.b16 %v85
  %v118 = vunpack.c.l.b16 %v86
  %v119 = vunpack.c.l.b16 %v87
  %v120 = vunpack.c.l.b16 %v88
  %v121 = vunpack.c.l.b16 %v89
  %v122 = vpack.c.b16 %v107, %v106
  %v123 = vpack.c.b16 %v109, %v108
  %v124 = vpack.c.b16 %v111, %v110
  %v125 = vpack.c.b16 %v113, %v112
  %v126 = vpack.c.b16 %v115, %v114
  %v127 = vpack.c.b16 %v117, %v116
  %v128 = vpack.c.b16 %v119, %v118
  %v129 = vpack.c.b16 %v121, %v120
  %138 = vmatprep.subr.bf16.mxu0 0
  %139 = vmatpush1.bf16.msra.mxu0 %v122
  %140 = vmatprep.subr.bf16.mxu0 0
  %141 = vmatpush1.bf16.msra.mxu0 %v123
  %142 = vmatprep.subr.bf16.mxu0 0
  %143 = vmatpush1.bf16.msra.mxu0 %v124
  %144 = vmatprep.subr.bf16.mxu0 0
  %145 = vmatpush1.bf16.msra.mxu0 %v125
  %146 = vmatprep.subr.bf16.mxu0 0
  %147 = vmatpush1.bf16.msra.mxu0 %v126
  %148 = vmatprep.subr.bf16.mxu0 0
  %149 = vmatpush1.bf16.msra.mxu0 %v127
  %150 = vmatprep.subr.bf16.mxu0 0
  %151 = vmatpush1.bf16.msra.mxu0 %v128
  %152 = vmatprep.subr.bf16.mxu0 0
  %153 = vmatpush1.bf16.msra.mxu0 %v129
  %154 = vmatprep.subr.bf16.mxu0 0
  %155 = vmatpush1.bf16.msra.mxu0 0
  %156 = vmatprep.subr.bf16.mxu0 0
  %157 = vmatpush1.bf16.msra.mxu0 0
  %158 = vmatprep.subr.bf16.mxu0 0
  %159 = vmatpush1.bf16.msra.mxu0 0
  %160 = vmatprep.subr.bf16.mxu0 0
  %161 = vmatpush1.bf16.msra.mxu0 0
  %162 = vmatprep.subr.bf16.mxu0 0
  %163 = vmatpush1.bf16.msra.mxu0 0
  %164 = vmatprep.subr.bf16.mxu0 0
  %165 = vmatpush1.bf16.msra.mxu0 0
  %166 = vmatprep.subr.bf16.mxu0 0
  %167 = vmatpush1.bf16.msra.mxu0 0
  %168 = vmatprep.subr.bf16.mxu0 0
  %169 = vmatpush1.bf16.msra.mxu0 0
  %170 = vmatprep.mubr.bf16.mxu0 0
  %171 = vmatmul.mubr.bf16.gmra.mrb[0].mxu0 %v58
  %v172 = vpop.f32.mrb[0].mxu0
  %v173 = vadd.f32 0.0, %v172
  %v174 = vpop.f32.mrb[0].mxu0
  %v175 = vpop.f32.mrb[0].mxu0
  %v176 = vadd.f32 0.0, %v175
  %v177 = vpop.f32.mrb[0].mxu0
  %178 = vmatprep.mubr.bf16.mxu0 0
  %179 = vmatmul.mubr.bf16.gmra.mrb[0].mxu0 %v59
  %v180 = vpop.f32.mrb[0].mxu0
  %v181 = vadd.f32 0.0, %v180
  %v182 = vpop.f32.mrb[0].mxu0
  %v183 = vpop.f32.mrb[0].mxu0
  %v184 = vadd.f32 0.0, %v183
  %v185 = vpop.f32.mrb[0].mxu0
  %186 = vmatprep.mubr.bf16.mxu0 0
  %187 = vmatmul.mubr.bf16.gmra.mrb[0].mxu0 %v60
  %v188 = vpop.f32.mrb[0].mxu0
  %v189 = vadd.f32 0.0, %v188
  %v190 = vpop.f32.mrb[0].mxu0
  %v191 = vpop.f32.mrb[0].mxu0
  %v192 = vadd.f32 0.0, %v191
  %v193 = vpop.f32.mrb[0].mxu0
  %194 = vmatprep.mubr.bf16.mxu0 0
  %195 = vmatmul.mubr.bf16.gmra.mrb[0].mxu0 %v61
  %v196 = vpop.f32.mrb[0].mxu0
  %v197 = vadd.f32 0.0, %v196
  %v198 = vpop.f32.mrb[0].mxu0
  %v199 = vpop.f32.mrb[0].mxu0
  %v200 = vadd.f32 0.0, %v199
  %v201 = vpop.f32.mrb[0].mxu0
  %202 = vmatprep.mubr.bf16.mxu0 0
  %203 = vmatmul.mubr.bf16.gmra.mrb[0].mxu0 %v62
  %v204 = vpop.f32.mrb[0].mxu0
  %v205 = vadd.f32 0.0, %v204
  %v206 = vpop.f32.mrb[0].mxu0
  %v207 = vpop.f32.mrb[0].mxu0
  %v208 = vadd.f32 0.0, %v207
  %v209 = vpop.f32.mrb[0].mxu0
  %210 = vmatprep.mubr.bf16.mxu0 0
  %211 = vmatmul.mubr.bf16.gmra.mrb[0].mxu0 %v63
  %v212 = vpop.f32.mrb[0].mxu0
  %v213 = vadd.f32 0.0, %v212
  %v214 = vpop.f32.mrb[0].mxu0
  %v215 = vpop.f32.mrb[0].mxu0
  %v216 = vadd.f32 0.0, %v215
  %v217 = vpop.f32.mrb[0].mxu0
  %218 = vmatprep.mubr.bf16.mxu0 0
  %219 = vmatmul.mubr.bf16.gmra.mrb[0].mxu0 %v64
  %v220 = vpop.f32.mrb[0].mxu0
  %v221 = vadd.f32 0.0, %v220
  %v222 = vpop.f32.mrb[0].mxu0
  %v223 = vpop.f32.mrb[0].mxu0
  %v224 = vadd.f32 0.0, %v223
  %v225 = vpop.f32.mrb[0].mxu0
  %226 = vmatprep.mubr.bf16.mxu0 0
  %227 = vmatmul.mubr.bf16.gmra.mrb[0].mxu0 %v65
  %v228 = vpop.f32.mrb[0].mxu0
  %v229 = vadd.f32 0.0, %v228
  %v230 = vpop.f32.mrb[0].mxu0
  %v231 = vpop.f32.mrb[0].mxu0
  %v232 = vadd.f32 0.0, %v231
  %v233 = vpop.f32.mrb[0].mxu0
  %234 = vmatprep.mubr.bf16.mxu0 0
  %235 = vmatmul.mubr.bf16.gmra.mrb[0].mxu0 %v66
  %v236 = vpop.f32.mrb[0].mxu0
  %v237 = vadd.f32 0.0, %v236
  %v238 = vpop.f32.mrb[0].mxu0
  %v239 = vpop.f32.mrb[0].mxu0
  %v240 = vadd.f32 0.0, %v239
  %v241 = vpop.f32.mrb[0].mxu0
  %242 = vmatprep.mubr.bf16.mxu0 0
  %243 = vmatmul.mubr.bf16.gmra.mrb[0].mxu0 %v67
  %v244 = vpop.f32.mrb[0].mxu0
  %v245 = vadd.f32 0.0, %v244
  %v246 = vpop.f32.mrb[0].mxu0
  %v247 = vpop.f32.mrb[0].mxu0
  %v248 = vadd.f32 0.0, %v247
  %v249 = vpop.f32.mrb[0].mxu0
  %250 = vmatprep.mubr.bf16.mxu0 0
  %251 = vmatmul.mubr.bf16.gmra.mrb[0].mxu0 %v68
  %v252 = vpop.f32.mrb[0].mxu0
  %v253 = vadd.f32 0.0, %v252
  %v254 = vpop.f32.mrb[0].mxu0
  %v255 = vpop.f32.mrb[0].mxu0
  %v256 = vadd.f32 0.0, %v255
  %v257 = vpop.f32.mrb[0].mxu0
  %258 = vmatprep.mubr.bf16.mxu0 0
  %259 = vmatmul.mubr.bf16.gmra.mrb[0].mxu0 %v69
  %v260 = vpop.f32.mrb[0].mxu0
  %v261 = vadd.f32 0.0, %v260
  %v262 = vpop.f32.mrb[0].mxu0
  %v263 = vpop.f32.mrb[0].mxu0
  %v264 = vadd.f32 0.0, %v263
  %v265 = vpop.f32.mrb[0].mxu0
  %266 = vmatprep.mubr.bf16.mxu0 0
  %267 = vmatmul.mubr.bf16.gmra.mrb[0].mxu0 %v70
  %v268 = vpop.f32.mrb[0].mxu0
  %v269 = vadd.f32 0.0, %v268
  %v270 = vpop.f32.mrb[0].mxu0
  %v271 = vpop.f32.mrb[0].mxu0
  %v272 = vadd.f32 0.0, %v271
  %v273 = vpop.f32.mrb[0].mxu0
  %274 = vmatprep.mubr.bf16.mxu0 0
  %275 = vmatmul.mubr.bf16.gmra.mrb[0].mxu0 %v71
  %v276 = vpop.f32.mrb[0].mxu0
  %v277 = vadd.f32 0.0, %v276
  %v278 = vpop.f32.mrb[0].mxu0
  %v279 = vpop.f32.mrb[0].mxu0
  %v280 = vadd.f32 0.0, %v279
  %v281 = vpop.f32.mrb[0].mxu0
  %282 = vmatprep.mubr.bf16.mxu0 0
  %283 = vmatmul.mubr.bf16.gmra.mrb[0].mxu0 %v72
  %v284 = vpop.f32.mrb[0].mxu0
  %v285 = vadd.f32 0.0, %v284
  %v286 = vpop.f32.mrb[0].mxu0
  %v287 = vpop.f32.mrb[0].mxu0
  %v288 = vadd.f32 0.0, %v287
  %v289 = vpop.f32.mrb[0].mxu0
  %290 = vmatprep.mubr.bf16.mxu0 0
  %291 = vmatmul.mubr.bf16.gmra.mrb[0].mxu0 %v73
  %v292 = vpop.f32.mrb[0].mxu0
  %v293 = vadd.f32 0.0, %v292
  %v294 = vpop.f32.mrb[0].mxu0
  %v295 = vpop.f32.mrb[0].mxu0
  %v296 = vadd.f32 0.0, %v295
  %v297 = vpop.f32.mrb[0].mxu0
  %298 = vdwg.mxu0
  %v299 = vpack.c.bf16 %v176, %v173
  %v300 = vpack.c.bf16 %v184, %v181
  %v301 = vpack.c.bf16 %v192, %v189
  %v302 = vpack.c.bf16 %v200, %v197
  %v303 = vpack.c.bf16 %v208, %v205
  %v304 = vpack.c.bf16 %v216, %v213
  %v305 = vpack.c.bf16 %v224, %v221
  %v306 = vpack.c.bf16 %v232, %v229
  %v307 = vpack.c.bf16 %v240, %v237
  %v308 = vpack.c.bf16 %v248, %v245
  %v309 = vpack.c.bf16 %v256, %v253
  %v310 = vpack.c.bf16 %v264, %v261
  %v311 = vpack.c.bf16 %v272, %v269
  %v312 = vpack.c.bf16 %v280, %v277
  %v313 = vpack.c.bf16 %v288, %v285
  %v314 = vpack.c.bf16 %v296, %v293
  %v316 = vpack.i.b16 %v25, %v25
  %v318 = vlaneseq
  %v319 = vshrl.u32 %v318, 7
  %v320 = vsub.s32 0, %v319
  %v321 = vrot.slane %v316, %v320
  %v322 = vadd.bf16 %v299, %v321
  %v323 = vadd.bf16 %v300, %v321
  %v324 = vadd.bf16 %v301, %v321
  %v325 = vadd.bf16 %v302, %v321
  %v326 = vadd.bf16 %v303, %v321
  %v327 = vadd.bf16 %v304, %v321
  %v328 = vadd.bf16 %v305, %v321
  %v329 = vadd.bf16 %v306, %v321
  %v330 = vadd.bf16 %v307, %v321
  %v331 = vadd.bf16 %v308, %v321
  %v332 = vadd.bf16 %v309, %v321
  %v333 = vadd.bf16 %v310, %v321
  %v334 = vadd.bf16 %v311, %v321
  %v335 = vadd.bf16 %v312, %v321
  %v336 = vadd.bf16 %v313, %v321
  %v337 = vadd.bf16 %v314, %v321
  %v338 = vmax.bf16 %v322, 0
  %v339 = vmax.bf16 %v323, 0
  %v340 = vmax.bf16 %v324, 0
  %v341 = vmax.bf16 %v325, 0
  %v342 = vmax.bf16 %v326, 0
  %v343 = vmax.bf16 %v327, 0
  %v344 = vmax.bf16 %v328, 0
  %v345 = vmax.bf16 %v329, 0
  %v346 = vmax.bf16 %v330, 0
  %v347 = vmax.bf16 %v331, 0
  %v348 = vmax.bf16 %v332, 0
  %v349 = vmax.bf16 %v333, 0
  %v350 = vmax.bf16 %v334, 0
  %v351 = vmax.bf16 %v335, 0
  %v352 = vmax.bf16 %v336, 0
  %v353 = vmax.bf16 %v337, 0
  %v354 = vld [vmem:[%s2] sm:$0xf]
  %v355 = vld [vmem:[%s2 + $0x4] sm:$0xf]
  %v356 = vld [vmem:[%s2 + $0x8] sm:$0xf]
  %v357 = vld [vmem:[%s2 + $0xc] sm:$0xf]
  %v358 = vld [vmem:[%s2 + $0x10] sm:$0xf]
  %v359 = vld [vmem:[%s2 + $0x14] sm:$0xf]
  %v360 = vld [vmem:[%s2 + $0x18] sm:$0xf]
  %v361 = vld [vmem:[%s2 + $0x1c] sm:$0xf]
  %v362 = vld [vmem:[%s2 + $0x20] sm:$0xf]
  %v363 = vld [vmem:[%s2 + $0x24] sm:$0xf]
  %v364 = vld [vmem:[%s2 + $0x28] sm:$0xf]
  %v365 = vld [vmem:[%s2 + $0x2c] sm:$0xf]
  %v366 = vld [vmem:[%s2 + $0x30] sm:$0xf]
  %v367 = vld [vmem:[%s2 + $0x34] sm:$0xf]
  %v368 = vld [vmem:[%s2 + $0x38] sm:$0xf]
  %v369 = vld [vmem:[%s2 + $0x3c] sm:$0xf]
  %v386 = vunpack.c.l.b16 %v354
  %v387 = vunpack.c.l.b16 %v355
  %v388 = vunpack.c.l.b16 %v356
  %v389 = vunpack.c.l.b16 %v357
  %v390 = vunpack.c.l.b16 %v358
  %v391 = vunpack.c.l.b16 %v359
  %v392 = vunpack.c.l.b16 %v360
  %v393 = vunpack.c.l.b16 %v361
  %v394 = vunpack.c.l.b16 %v362
  %v395 = vunpack.c.l.b16 %v363
  %v396 = vunpack.c.l.b16 %v364
  %v397 = vunpack.c.l.b16 %v365
  %v398 = vunpack.c.l.b16 %v366
  %v399 = vunpack.c.l.b16 %v367
  %v400 = vunpack.c.l.b16 %v368
  %v401 = vunpack.c.l.b16 %v369
  %v402 = vpack.c.b16 %v387, %v386
  %v403 = vpack.c.b16 %v389, %v388
  %v404 = vpack.c.b16 %v391, %v390
  %v405 = vpack.c.b16 %v393, %v392
  %v406 = vpack.c.b16 %v395, %v394
  %v407 = vpack.c.b16 %v397, %v396
  %v408 = vpack.c.b16 %v399, %v398
  %v409 = vpack.c.b16 %v401, %v400
  %418 = vmatprep.subr.bf16.mxu0 0
  %419 = vmatpush1.bf16.msra.mxu0 %v402
  %420 = vmatprep.subr.bf16.mxu0 0
  %421 = vmatpush1.bf16.msra.mxu0 %v403
  %422 = vmatprep.subr.bf16.mxu0 0
  %423 = vmatpush1.bf16.msra.mxu0 %v404
  %424 = vmatprep.subr.bf16.mxu0 0
  %425 = vmatpush1.bf16.msra.mxu0 %v405
  %426 = vmatprep.subr.bf16.mxu0 0
  %427 = vmatpush1.bf16.msra.mxu0 %v406
  %428 = vmatprep.subr.bf16.mxu0 0
  %429 = vmatpush1.bf16.msra.mxu0 %v407
  %430 = vmatprep.subr.bf16.mxu0 0
  %431 = vmatpush1.bf16.msra.mxu0 %v408
  %432 = vmatprep.subr.bf16.mxu0 0
  %433 = vmatpush1.bf16.msra.mxu0 %v409
  %434 = vmatprep.subr.bf16.mxu0 0
  %435 = vmatpush1.bf16.msra.mxu0 0
  %436 = vmatprep.subr.bf16.mxu0 0
  %437 = vmatpush1.bf16.msra.mxu0 0
  %438 = vmatprep.subr.bf16.mxu0 0
  %439 = vmatpush1.bf16.msra.mxu0 0
  %440 = vmatprep.subr.bf16.mxu0 0
  %441 = vmatpush1.bf16.msra.mxu0 0
  %442 = vmatprep.subr.bf16.mxu0 0
  %443 = vmatpush1.bf16.msra.mxu0 0
  %444 = vmatprep.subr.bf16.mxu0 0
  %445 = vmatpush1.bf16.msra.mxu0 0
  %446 = vmatprep.subr.bf16.mxu0 0
  %447 = vmatpush1.bf16.msra.mxu0 0
  %448 = vmatprep.subr.bf16.mxu0 0
  %449 = vmatpush1.bf16.msra.mxu0 0
  %450 = vmatprep.mubr.bf16.mxu0 0
  %451 = vmatmul.mubr.bf16.gmra.mrb[0].mxu0 %v338
  %v452 = vpop.f32.mrb[0].mxu0
  %v453 = vadd.f32 0.0, %v452
  %v454 = vpop.f32.mrb[0].mxu0
  %v455 = vpop.f32.mrb[0].mxu0
  %v456 = vadd.f32 0.0, %v455
  %v457 = vpop.f32.mrb[0].mxu0
  %458 = vmatprep.mubr.bf16.mxu0 0
  %459 = vmatmul.mubr.bf16.gmra.mrb[0].mxu0 %v339
  %v460 = vpop.f32.mrb[0].mxu0
  %v461 = vadd.f32 0.0, %v460
  %v462 = vpop.f32.mrb[0].mxu0
  %v463 = vpop.f32.mrb[0].mxu0
  %v464 = vadd.f32 0.0, %v463
  %v465 = vpop.f32.mrb[0].mxu0
  %466 = vmatprep.mubr.bf16.mxu0 0
  %467 = vmatmul.mubr.bf16.gmra.mrb[0].mxu0 %v340
  %v468 = vpop.f32.mrb[0].mxu0
  %v469 = vadd.f32 0.0, %v468
  %v470 = vpop.f32.mrb[0].mxu0
  %v471 = vpop.f32.mrb[0].mxu0
  %v472 = vadd.f32 0.0, %v471
  %v473 = vpop.f32.mrb[0].mxu0
  %474 = vmatprep.mubr.bf16.mxu0 0
  %475 = vmatmul.mubr.bf16.gmra.mrb[0].mxu0 %v341
  %v476 = vpop.f32.mrb[0].mxu0
  %v477 = vadd.f32 0.0, %v476
  %v478 = vpop.f32.mrb[0].mxu0
  %v479 = vpop.f32.mrb[0].mxu0
  %v480 = vadd.f32 0.0, %v479
  %v481 = vpop.f32.mrb[0].mxu0
  %482 = vmatprep.mubr.bf16.mxu0 0
  %483 = vmatmul.mubr.bf16.gmra.mrb[0].mxu0 %v342
  %v484 = vpop.f32.mrb[0].mxu0
  %v485 = vadd.f32 0.0, %v484
  %v486 = vpop.f32.mrb[0].mxu0
  %v487 = vpop.f32.mrb[0].mxu0
  %v488 = vadd.f32 0.0, %v487
  %v489 = vpop.f32.mrb[0].mxu0
  %490 = vmatprep.mubr.bf16.mxu0 0
  %491 = vmatmul.mubr.bf16.gmra.mrb[0].mxu0 %v343
  %v492 = vpop.f32.mrb[0].mxu0
  %v493 = vadd.f32 0.0, %v492
  %v494 = vpop.f32.mrb[0].mxu0
  %v495 = vpop.f32.mrb[0].mxu0
  %v496 = vadd.f32 0.0, %v495
  %v497 = vpop.f32.mrb[0].mxu0
  %498 = vmatprep.mubr.bf16.mxu0 0
  %499 = vmatmul.mubr.bf16.gmra.mrb[0].mxu0 %v344
  %v500 = vpop.f32.mrb[0].mxu0
  %v501 = vadd.f32 0.0, %v500
  %v502 = vpop.f32.mrb[0].mxu0
  %v503 = vpop.f32.mrb[0].mxu0
  %v504 = vadd.f32 0.0, %v503
  %v505 = vpop.f32.mrb[0].mxu0
  %506 = vmatprep.mubr.bf16.mxu0 0
  %507 = vmatmul.mubr.bf16.gmra.mrb[0].mxu0 %v345
  %v508 = vpop.f32.mrb[0].mxu0
  %v509 = vadd.f32 0.0, %v508
  %v510 = vpop.f32.mrb[0].mxu0
  %v511 = vpop.f32.mrb[0].mxu0
  %v512 = vadd.f32 0.0, %v511
  %v513 = vpop.f32.mrb[0].mxu0
  %514 = vmatprep.mubr.bf16.mxu0 0
  %515 = vmatmul.mubr.bf16.gmra.mrb[0].mxu0 %v346
  %v516 = vpop.f32.mrb[0].mxu0
  %v517 = vadd.f32 0.0, %v516
  %v518 = vpop.f32.mrb[0].mxu0
  %v519 = vpop.f32.mrb[0].mxu0
  %v520 = vadd.f32 0.0, %v519
  %v521 = vpop.f32.mrb[0].mxu0
  %522 = vmatprep.mubr.bf16.mxu0 0
  %523 = vmatmul.mubr.bf16.gmra.mrb[0].mxu0 %v347
  %v524 = vpop.f32.mrb[0].mxu0
  %v525 = vadd.f32 0.0, %v524
  %v526 = vpop.f32.mrb[0].mxu0
  %v527 = vpop.f32.mrb[0].mxu0
  %v528 = vadd.f32 0.0, %v527
  %v529 = vpop.f32.mrb[0].mxu0
  %530 = vmatprep.mubr.bf16.mxu0 0
  %531 = vmatmul.mubr.bf16.gmra.mrb[0].mxu0 %v348
  %v532 = vpop.f32.mrb[0].mxu0
  %v533 = vadd.f32 0.0, %v532
  %v534 = vpop.f32.mrb[0].mxu0
  %v535 = vpop.f32.mrb[0].mxu0
  %v536 = vadd.f32 0.0, %v535
  %v537 = vpop.f32.mrb[0].mxu0
  %538 = vmatprep.mubr.bf16.mxu0 0
  %539 = vmatmul.mubr.bf16.gmra.mrb[0].mxu0 %v349
  %v540 = vpop.f32.mrb[0].mxu0
  %v541 = vadd.f32 0.0, %v540
  %v542 = vpop.f32.mrb[0].mxu0
  %v543 = vpop.f32.mrb[0].mxu0
  %v544 = vadd.f32 0.0, %v543
  %v545 = vpop.f32.mrb[0].mxu0
  %546 = vmatprep.mubr.bf16.mxu0 0
  %547 = vmatmul.mubr.bf16.gmra.mrb[0].mxu0 %v350
  %v548 = vpop.f32.mrb[0].mxu0
  %v549 = vadd.f32 0.0, %v548
  %v550 = vpop.f32.mrb[0].mxu0
  %v551 = vpop.f32.mrb[0].mxu0
  %v552 = vadd.f32 0.0, %v551
  %v553 = vpop.f32.mrb[0].mxu0
  %554 = vmatprep.mubr.bf16.mxu0 0
  %555 = vmatmul.mubr.bf16.gmra.mrb[0].mxu0 %v351
  %v556 = vpop.f32.mrb[0].mxu0
  %v557 = vadd.f32 0.0, %v556
  %v558 = vpop.f32.mrb[0].mxu0
  %v559 = vpop.f32.mrb[0].mxu0
  %v560 = vadd.f32 0.0, %v559
  %v561 = vpop.f32.mrb[0].mxu0
  %562 = vmatprep.mubr.bf16.mxu0 0
  %563 = vmatmul.mubr.bf16.gmra.mrb[0].mxu0 %v352
  %v564 = vpop.f32.mrb[0].mxu0
  %v565 = vadd.f32 0.0, %v564
  %v566 = vpop.f32.mrb[0].mxu0
  %v567 = vpop.f32.mrb[0].mxu0
  %v568 = vadd.f32 0.0, %v567
  %v569 = vpop.f32.mrb[0].mxu0
  %570 = vmatprep.mubr.bf16.mxu0 0
  %571 = vmatmul.mubr.bf16.gmra.mrb[0].mxu0 %v353
  %v572 = vpop.f32.mrb[0].mxu0
  %v573 = vadd.f32 0.0, %v572
  %v574 = vpop.f32.mrb[0].mxu0
  %v575 = vpop.f32.mrb[0].mxu0
  %v576 = vadd.f32 0.0, %v575
  %v577 = vpop.f32.mrb[0].mxu0
  %578 = vdwg.mxu0
  %v579 = vpack.c.bf16 %v456, %v453
  %v580 = vpack.c.bf16 %v464, %v461
  %v581 = vpack.c.bf16 %v472, %v469
  %v582 = vpack.c.bf16 %v480, %v477
  %v583 = vpack.c.bf16 %v488, %v485
  %v584 = vpack.c.bf16 %v496, %v493
  %v585 = vpack.c.bf16 %v504, %v501
  %v586 = vpack.c.bf16 %v512, %v509
  %v587 = vpack.c.bf16 %v520, %v517
  %v588 = vpack.c.bf16 %v528, %v525
  %v589 = vpack.c.bf16 %v536, %v533
  %v590 = vpack.c.bf16 %v544, %v541
  %v591 = vpack.c.bf16 %v552, %v549
  %v592 = vpack.c.bf16 %v560, %v557
  %v593 = vpack.c.bf16 %v568, %v565
  %v594 = vpack.c.bf16 %v576, %v573
  %v595 = vshrl.u32 %v25, 16
  %v596 = vpack.i.b16 %v595, %v595
  %v598 = vlaneseq
  %v599 = vshrl.u32 %v598, 7
  %v600 = vsub.s32 0, %v599
  %v601 = vrot.slane %v596, %v600
  %v602 = vadd.bf16 %v579, %v601
  %v603 = vadd.bf16 %v580, %v601
  %v604 = vadd.bf16 %v581, %v601
  %v605 = vadd.bf16 %v582, %v601
  %v606 = vadd.bf16 %v583, %v601
  %v607 = vadd.bf16 %v584, %v601
  %v608 = vadd.bf16 %v585, %v601
  %v609 = vadd.bf16 %v586, %v601
  %v610 = vadd.bf16 %v587, %v601
  %v611 = vadd.bf16 %v588, %v601
  %v612 = vadd.bf16 %v589, %v601
  %v613 = vadd.bf16 %v590, %v601
  %v614 = vadd.bf16 %v591, %v601
  %v615 = vadd.bf16 %v592, %v601
  %v616 = vadd.bf16 %v593, %v601
  %v617 = vadd.bf16 %v594, %v601
  %v618 = vmax.bf16 %v602, 0
  %v619 = vmax.bf16 %v603, 0
  %v620 = vmax.bf16 %v604, 0
  %v621 = vmax.bf16 %v605, 0
  %v622 = vmax.bf16 %v606, 0
  %v623 = vmax.bf16 %v607, 0
  %v624 = vmax.bf16 %v608, 0
  %v625 = vmax.bf16 %v609, 0
  %v626 = vmax.bf16 %v610, 0
  %v627 = vmax.bf16 %v611, 0
  %v628 = vmax.bf16 %v612, 0
  %v629 = vmax.bf16 %v613, 0
  %v630 = vmax.bf16 %v614, 0
  %v631 = vmax.bf16 %v615, 0
  %v632 = vmax.bf16 %v616, 0
  %v633 = vmax.bf16 %v617, 0
  %v634 = vld [vmem:[%s3] sm:$0xf]
  %v635 = vld [vmem:[%s3 + $0x4] sm:$0xf]
  %v636 = vld [vmem:[%s3 + $0x8] sm:$0xf]
  %v637 = vld [vmem:[%s3 + $0xc] sm:$0xf]
  %v638 = vld [vmem:[%s3 + $0x10] sm:$0xf]
  %v639 = vld [vmem:[%s3 + $0x14] sm:$0xf]
  %v640 = vld [vmem:[%s3 + $0x18] sm:$0xf]
  %v641 = vld [vmem:[%s3 + $0x1c] sm:$0xf]
  %v642 = vld [vmem:[%s3 + $0x20] sm:$0xf]
  %v643 = vld [vmem:[%s3 + $0x24] sm:$0xf]
  %v644 = vld [vmem:[%s3 + $0x28] sm:$0xf]
  %v645 = vld [vmem:[%s3 + $0x2c] sm:$0xf]
  %v646 = vld [vmem:[%s3 + $0x30] sm:$0xf]
  %v647 = vld [vmem:[%s3 + $0x34] sm:$0xf]
  %v648 = vld [vmem:[%s3 + $0x38] sm:$0xf]
  %v649 = vld [vmem:[%s3 + $0x3c] sm:$0xf]
  %v666 = vunpack.c.l.b16 %v634
  %v667 = vunpack.c.l.b16 %v635
  %v668 = vunpack.c.l.b16 %v636
  %v669 = vunpack.c.l.b16 %v637
  %v670 = vunpack.c.l.b16 %v638
  %v671 = vunpack.c.l.b16 %v639
  %v672 = vunpack.c.l.b16 %v640
  %v673 = vunpack.c.l.b16 %v641
  %v674 = vunpack.c.l.b16 %v642
  %v675 = vunpack.c.l.b16 %v643
  %v676 = vunpack.c.l.b16 %v644
  %v677 = vunpack.c.l.b16 %v645
  %v678 = vunpack.c.l.b16 %v646
  %v679 = vunpack.c.l.b16 %v647
  %v680 = vunpack.c.l.b16 %v648
  %v681 = vunpack.c.l.b16 %v649
  %v682 = vpack.c.b16 %v667, %v666
  %v683 = vpack.c.b16 %v669, %v668
  %v684 = vpack.c.b16 %v671, %v670
  %v685 = vpack.c.b16 %v673, %v672
  %v686 = vpack.c.b16 %v675, %v674
  %v687 = vpack.c.b16 %v677, %v676
  %v688 = vpack.c.b16 %v679, %v678
  %v689 = vpack.c.b16 %v681, %v680
  %698 = vmatprep.subr.bf16.mxu0 0
  %699 = vmatpush1.bf16.msra.mxu0 %v682
  %700 = vmatprep.subr.bf16.mxu0 0
  %701 = vmatpush1.bf16.msra.mxu0 %v683
  %702 = vmatprep.subr.bf16.mxu0 0
  %703 = vmatpush1.bf16.msra.mxu0 %v684
  %704 = vmatprep.subr.bf16.mxu0 0
  %705 = vmatpush1.bf16.msra.mxu0 %v685
  %706 = vmatprep.subr.bf16.mxu0 0
  %707 = vmatpush1.bf16.msra.mxu0 %v686
  %708 = vmatprep.subr.bf16.mxu0 0
  %709 = vmatpush1.bf16.msra.mxu0 %v687
  %710 = vmatprep.subr.bf16.mxu0 0
  %711 = vmatpush1.bf16.msra.mxu0 %v688
  %712 = vmatprep.subr.bf16.mxu0 0
  %713 = vmatpush1.bf16.msra.mxu0 %v689
  %714 = vmatprep.subr.bf16.mxu0 0
  %715 = vmatpush1.bf16.msra.mxu0 0
  %716 = vmatprep.subr.bf16.mxu0 0
  %717 = vmatpush1.bf16.msra.mxu0 0
  %718 = vmatprep.subr.bf16.mxu0 0
  %719 = vmatpush1.bf16.msra.mxu0 0
  %720 = vmatprep.subr.bf16.mxu0 0
  %721 = vmatpush1.bf16.msra.mxu0 0
  %722 = vmatprep.subr.bf16.mxu0 0
  %723 = vmatpush1.bf16.msra.mxu0 0
  %724 = vmatprep.subr.bf16.mxu0 0
  %725 = vmatpush1.bf16.msra.mxu0 0
  %726 = vmatprep.subr.bf16.mxu0 0
  %727 = vmatpush1.bf16.msra.mxu0 0
  %728 = vmatprep.subr.bf16.mxu0 0
  %729 = vmatpush1.bf16.msra.mxu0 0
  %730 = vmatprep.mubr.bf16.mxu0 0
  %731 = vmatmul.mubr.bf16.gmra.mrb[0].mxu0 %v618
  %v732 = vpop.f32.mrb[0].mxu0
  %v733 = vadd.f32 0.0, %v732
  %v734 = vpop.f32.mrb[0].mxu0
  %v735 = vpop.f32.mrb[0].mxu0
  %v736 = vadd.f32 0.0, %v735
  %v737 = vpop.f32.mrb[0].mxu0
  %738 = vmatprep.mubr.bf16.mxu0 0
  %739 = vmatmul.mubr.bf16.gmra.mrb[0].mxu0 %v619
  %v740 = vpop.f32.mrb[0].mxu0
  %v741 = vadd.f32 0.0, %v740
  %v742 = vpop.f32.mrb[0].mxu0
  %v743 = vpop.f32.mrb[0].mxu0
  %v744 = vadd.f32 0.0, %v743
  %v745 = vpop.f32.mrb[0].mxu0
  %746 = vmatprep.mubr.bf16.mxu0 0
  %747 = vmatmul.mubr.bf16.gmra.mrb[0].mxu0 %v620
  %v748 = vpop.f32.mrb[0].mxu0
  %v749 = vadd.f32 0.0, %v748
  %v750 = vpop.f32.mrb[0].mxu0
  %v751 = vpop.f32.mrb[0].mxu0
  %v752 = vadd.f32 0.0, %v751
  %v753 = vpop.f32.mrb[0].mxu0
  %754 = vmatprep.mubr.bf16.mxu0 0
  %755 = vmatmul.mubr.bf16.gmra.mrb[0].mxu0 %v621
  %v756 = vpop.f32.mrb[0].mxu0
  %v757 = vadd.f32 0.0, %v756
  %v758 = vpop.f32.mrb[0].mxu0
  %v759 = vpop.f32.mrb[0].mxu0
  %v760 = vadd.f32 0.0, %v759
  %v761 = vpop.f32.mrb[0].mxu0
  %762 = vmatprep.mubr.bf16.mxu0 0
  %763 = vmatmul.mubr.bf16.gmra.mrb[0].mxu0 %v622
  %v764 = vpop.f32.mrb[0].mxu0
  %v765 = vadd.f32 0.0, %v764
  %v766 = vpop.f32.mrb[0].mxu0
  %v767 = vpop.f32.mrb[0].mxu0
  %v768 = vadd.f32 0.0, %v767
  %v769 = vpop.f32.mrb[0].mxu0
  %770 = vmatprep.mubr.bf16.mxu0 0
  %771 = vmatmul.mubr.bf16.gmra.mrb[0].mxu0 %v623
  %v772 = vpop.f32.mrb[0].mxu0
  %v773 = vadd.f32 0.0, %v772
  %v774 = vpop.f32.mrb[0].mxu0
  %v775 = vpop.f32.mrb[0].mxu0
  %v776 = vadd.f32 0.0, %v775
  %v777 = vpop.f32.mrb[0].mxu0
  %778 = vmatprep.mubr.bf16.mxu0 0
  %779 = vmatmul.mubr.bf16.gmra.mrb[0].mxu0 %v624
  %v780 = vpop.f32.mrb[0].mxu0
  %v781 = vadd.f32 0.0, %v780
  %v782 = vpop.f32.mrb[0].mxu0
  %v783 = vpop.f32.mrb[0].mxu0
  %v784 = vadd.f32 0.0, %v783
  %v785 = vpop.f32.mrb[0].mxu0
  %786 = vmatprep.mubr.bf16.mxu0 0
  %787 = vmatmul.mubr.bf16.gmra.mrb[0].mxu0 %v625
  %v788 = vpop.f32.mrb[0].mxu0
  %v789 = vadd.f32 0.0, %v788
  %v790 = vpop.f32.mrb[0].mxu0
  %v791 = vpop.f32.mrb[0].mxu0
  %v792 = vadd.f32 0.0, %v791
  %v793 = vpop.f32.mrb[0].mxu0
  %794 = vmatprep.mubr.bf16.mxu0 0
  %795 = vmatmul.mubr.bf16.gmra.mrb[0].mxu0 %v626
  %v796 = vpop.f32.mrb[0].mxu0
  %v797 = vadd.f32 0.0, %v796
  %v798 = vpop.f32.mrb[0].mxu0
  %v799 = vpop.f32.mrb[0].mxu0
  %v800 = vadd.f32 0.0, %v799
  %v801 = vpop.f32.mrb[0].mxu0
  %802 = vmatprep.mubr.bf16.mxu0 0
  %803 = vmatmul.mubr.bf16.gmra.mrb[0].mxu0 %v627
  %v804 = vpop.f32.mrb[0].mxu0
  %v805 = vadd.f32 0.0, %v804
  %v806 = vpop.f32.mrb[0].mxu0
  %v807 = vpop.f32.mrb[0].mxu0
  %v808 = vadd.f32 0.0, %v807
  %v809 = vpop.f32.mrb[0].mxu0
  %810 = vmatprep.mubr.bf16.mxu0 0
  %811 = vmatmul.mubr.bf16.gmra.mrb[0].mxu0 %v628
  %v812 = vpop.f32.mrb[0].mxu0
  %v813 = vadd.f32 0.0, %v812
  %v814 = vpop.f32.mrb[0].mxu0
  %v815 = vpop.f32.mrb[0].mxu0
  %v816 = vadd.f32 0.0, %v815
  %v817 = vpop.f32.mrb[0].mxu0
  %818 = vmatprep.mubr.bf16.mxu0 0
  %819 = vmatmul.mubr.bf16.gmra.mrb[0].mxu0 %v629
  %v820 = vpop.f32.mrb[0].mxu0
  %v821 = vadd.f32 0.0, %v820
  %v822 = vpop.f32.mrb[0].mxu0
  %v823 = vpop.f32.mrb[0].mxu0
  %v824 = vadd.f32 0.0, %v823
  %v825 = vpop.f32.mrb[0].mxu0
  %826 = vmatprep.mubr.bf16.mxu0 0
  %827 = vmatmul.mubr.bf16.gmra.mrb[0].mxu0 %v630
  %v828 = vpop.f32.mrb[0].mxu0
  %v829 = vadd.f32 0.0, %v828
  %v830 = vpop.f32.mrb[0].mxu0
  %v831 = vpop.f32.mrb[0].mxu0
  %v832 = vadd.f32 0.0, %v831
  %v833 = vpop.f32.mrb[0].mxu0
  %834 = vmatprep.mubr.bf16.mxu0 0
  %835 = vmatmul.mubr.bf16.gmra.mrb[0].mxu0 %v631
  %v836 = vpop.f32.mrb[0].mxu0
  %v837 = vadd.f32 0.0, %v836
  %v838 = vpop.f32.mrb[0].mxu0
  %v839 = vpop.f32.mrb[0].mxu0
  %v840 = vadd.f32 0.0, %v839
  %v841 = vpop.f32.mrb[0].mxu0
  %842 = vmatprep.mubr.bf16.mxu0 0
  %843 = vmatmul.mubr.bf16.gmra.mrb[0].mxu0 %v632
  %v844 = vpop.f32.mrb[0].mxu0
  %v845 = vadd.f32 0.0, %v844
  %v846 = vpop.f32.mrb[0].mxu0
  %v847 = vpop.f32.mrb[0].mxu0
  %v848 = vadd.f32 0.0, %v847
  %v849 = vpop.f32.mrb[0].mxu0
  %850 = vmatprep.mubr.bf16.mxu0 0
  %851 = vmatmul.mubr.bf16.gmra.mrb[0].mxu0 %v633
  %v852 = vpop.f32.mrb[0].mxu0
  %v853 = vadd.f32 0.0, %v852
  %v854 = vpop.f32.mrb[0].mxu0
  %v855 = vpop.f32.mrb[0].mxu0
  %v856 = vadd.f32 0.0, %v855
  %v857 = vpop.f32.mrb[0].mxu0
  %858 = vdwg.mxu0
  %v859 = vpack.c.bf16 %v736, %v733
  %v860 = vpack.c.bf16 %v744, %v741
  %v861 = vpack.c.bf16 %v752, %v749
  %v862 = vpack.c.bf16 %v760, %v757
  %v863 = vpack.c.bf16 %v768, %v765
  %v864 = vpack.c.bf16 %v776, %v773
  %v865 = vpack.c.bf16 %v784, %v781
  %v866 = vpack.c.bf16 %v792, %v789
  %v867 = vpack.c.bf16 %v800, %v797
  %v868 = vpack.c.bf16 %v808, %v805
  %v869 = vpack.c.bf16 %v816, %v813
  %v870 = vpack.c.bf16 %v824, %v821
  %v871 = vpack.c.bf16 %v832, %v829
  %v872 = vpack.c.bf16 %v840, %v837
  %v873 = vpack.c.bf16 %v848, %v845
  %v874 = vpack.c.bf16 %v856, %v853
  %v875 = vlaneseq
  %v876 = vshrl.u32 %v875, 7
  %v877 = vsub.s32 1, %v876
  %v878 = vrot.slane %v316, %v877
  %v879 = vadd.bf16 %v859, %v878
  %v880 = vadd.bf16 %v860, %v878
  %v881 = vadd.bf16 %v861, %v878
  %v882 = vadd.bf16 %v862, %v878
  %v883 = vadd.bf16 %v863, %v878
  %v884 = vadd.bf16 %v864, %v878
  %v885 = vadd.bf16 %v865, %v878
  %v886 = vadd.bf16 %v866, %v878
  %v887 = vadd.bf16 %v867, %v878
  %v888 = vadd.bf16 %v868, %v878
  %v889 = vadd.bf16 %v869, %v878
  %v890 = vadd.bf16 %v870, %v878
  %v891 = vadd.bf16 %v871, %v878
  %v892 = vadd.bf16 %v872, %v878
  %v893 = vadd.bf16 %v873, %v878
  %v894 = vadd.bf16 %v874, %v878
  %v895 = vmax.bf16 %v879, 0
  %v896 = vmax.bf16 %v880, 0
  %v897 = vmax.bf16 %v881, 0
  %v898 = vmax.bf16 %v882, 0
  %v899 = vmax.bf16 %v883, 0
  %v900 = vmax.bf16 %v884, 0
  %v901 = vmax.bf16 %v885, 0
  %v902 = vmax.bf16 %v886, 0
  %v903 = vmax.bf16 %v887, 0
  %v904 = vmax.bf16 %v888, 0
  %v905 = vmax.bf16 %v889, 0
  %v906 = vmax.bf16 %v890, 0
  %v907 = vmax.bf16 %v891, 0
  %v908 = vmax.bf16 %v892, 0
  %v909 = vmax.bf16 %v893, 0
  %v910 = vmax.bf16 %v894, 0
  %v911 = vld [vmem:[%s4] sm:$0xf]
  %v912 = vld [vmem:[%s4 + $0x4] sm:$0xf]
  %v913 = vld [vmem:[%s4 + $0x8] sm:$0xf]
  %v914 = vld [vmem:[%s4 + $0xc] sm:$0xf]
  %v915 = vld [vmem:[%s4 + $0x10] sm:$0xf]
  %v916 = vld [vmem:[%s4 + $0x14] sm:$0xf]
  %v917 = vld [vmem:[%s4 + $0x18] sm:$0xf]
  %v918 = vld [vmem:[%s4 + $0x1c] sm:$0xf]
  %v919 = vld [vmem:[%s4 + $0x20] sm:$0xf]
  %v920 = vld [vmem:[%s4 + $0x24] sm:$0xf]
  %v921 = vld [vmem:[%s4 + $0x28] sm:$0xf]
  %v922 = vld [vmem:[%s4 + $0x2c] sm:$0xf]
  %v923 = vld [vmem:[%s4 + $0x30] sm:$0xf]
  %v924 = vld [vmem:[%s4 + $0x34] sm:$0xf]
  %v925 = vld [vmem:[%s4 + $0x38] sm:$0xf]
  %v926 = vld [vmem:[%s4 + $0x3c] sm:$0xf]
  %v943 = vunpack.c.l.b16 %v911
  %v944 = vunpack.c.l.b16 %v912
  %v945 = vunpack.c.l.b16 %v913
  %v946 = vunpack.c.l.b16 %v914
  %v947 = vunpack.c.l.b16 %v915
  %v948 = vunpack.c.l.b16 %v916
  %v949 = vunpack.c.l.b16 %v917
  %v950 = vunpack.c.l.b16 %v918
  %v951 = vunpack.c.l.b16 %v919
  %v952 = vunpack.c.l.b16 %v920
  %v953 = vunpack.c.l.b16 %v921
  %v954 = vunpack.c.l.b16 %v922
  %v955 = vunpack.c.l.b16 %v923
  %v956 = vunpack.c.l.b16 %v924
  %v957 = vunpack.c.l.b16 %v925
  %v958 = vunpack.c.l.b16 %v926
  %v959 = vpack.c.b16 %v944, %v943
  %v960 = vpack.c.b16 %v946, %v945
  %v961 = vpack.c.b16 %v948, %v947
  %v962 = vpack.c.b16 %v950, %v949
  %v963 = vpack.c.b16 %v952, %v951
  %v964 = vpack.c.b16 %v954, %v953
  %v965 = vpack.c.b16 %v956, %v955
  %v966 = vpack.c.b16 %v958, %v957
  %975 = vmatprep.subr.bf16.mxu0 0
  %976 = vmatpush1.bf16.msra.mxu0 %v959
  %977 = vmatprep.subr.bf16.mxu0 0
  %978 = vmatpush1.bf16.msra.mxu0 %v960
  %979 = vmatprep.subr.bf16.mxu0 0
  %980 = vmatpush1.bf16.msra.mxu0 %v961
  %981 = vmatprep.subr.bf16.mxu0 0
  %982 = vmatpush1.bf16.msra.mxu0 %v962
  %983 = vmatprep.subr.bf16.mxu0 0
  %984 = vmatpush1.bf16.msra.mxu0 %v963
  %985 = vmatprep.subr.bf16.mxu0 0
  %986 = vmatpush1.bf16.msra.mxu0 %v964
  %987 = vmatprep.subr.bf16.mxu0 0
  %988 = vmatpush1.bf16.msra.mxu0 %v965
  %989 = vmatprep.subr.bf16.mxu0 0
  %990 = vmatpush1.bf16.msra.mxu0 %v966
  %991 = vmatprep.subr.bf16.mxu0 0
  %992 = vmatpush1.bf16.msra.mxu0 0
  %993 = vmatprep.subr.bf16.mxu0 0
  %994 = vmatpush1.bf16.msra.mxu0 0
  %995 = vmatprep.subr.bf16.mxu0 0
  %996 = vmatpush1.bf16.msra.mxu0 0
  %997 = vmatprep.subr.bf16.mxu0 0
  %998 = vmatpush1.bf16.msra.mxu0 0
  %999 = vmatprep.subr.bf16.mxu0 0
  %1000 = vmatpush1.bf16.msra.mxu0 0
  %1001 = vmatprep.subr.bf16.mxu0 0
  %1002 = vmatpush1.bf16.msra.mxu0 0
  %1003 = vmatprep.subr.bf16.mxu0 0
  %1004 = vmatpush1.bf16.msra.mxu0 0
  %1005 = vmatprep.subr.bf16.mxu0 0
  %1006 = vmatpush1.bf16.msra.mxu0 0
  %1007 = vmatprep.mubr.bf16.mxu0 0
  %1008 = vmatmul.mubr.bf16.gmra.mrb[0].mxu0 %v895
  %v1009 = vpop.f32.mrb[0].mxu0
  %v1010 = vadd.f32 0.0, %v1009
  %v1011 = vpop.f32.mrb[0].mxu0
  %v1012 = vpop.f32.mrb[0].mxu0
  %v1013 = vadd.f32 0.0, %v1012
  %v1014 = vpop.f32.mrb[0].mxu0
  %1015 = vmatprep.mubr.bf16.mxu0 0
  %1016 = vmatmul.mubr.bf16.gmra.mrb[0].mxu0 %v896
  %v1017 = vpop.f32.mrb[0].mxu0
  %v1018 = vadd.f32 0.0, %v1017
  %v1019 = vpop.f32.mrb[0].mxu0
  %v1020 = vpop.f32.mrb[0].mxu0
  %v1021 = vadd.f32 0.0, %v1020
  %v1022 = vpop.f32.mrb[0].mxu0
  %1023 = vmatprep.mubr.bf16.mxu0 0
  %1024 = vmatmul.mubr.bf16.gmra.mrb[0].mxu0 %v897
  %v1025 = vpop.f32.mrb[0].mxu0
  %v1026 = vadd.f32 0.0, %v1025
  %v1027 = vpop.f32.mrb[0].mxu0
  %v1028 = vpop.f32.mrb[0].mxu0
  %v1029 = vadd.f32 0.0, %v1028
  %v1030 = vpop.f32.mrb[0].mxu0
  %1031 = vmatprep.mubr.bf16.mxu0 0
  %1032 = vmatmul.mubr.bf16.gmra.mrb[0].mxu0 %v898
  %v1033 = vpop.f32.mrb[0].mxu0
  %v1034 = vadd.f32 0.0, %v1033
  %v1035 = vpop.f32.mrb[0].mxu0
  %v1036 = vpop.f32.mrb[0].mxu0
  %v1037 = vadd.f32 0.0, %v1036
  %v1038 = vpop.f32.mrb[0].mxu0
  %1039 = vmatprep.mubr.bf16.mxu0 0
  %1040 = vmatmul.mubr.bf16.gmra.mrb[0].mxu0 %v899
  %v1041 = vpop.f32.mrb[0].mxu0
  %v1042 = vadd.f32 0.0, %v1041
  %v1043 = vpop.f32.mrb[0].mxu0
  %v1044 = vpop.f32.mrb[0].mxu0
  %v1045 = vadd.f32 0.0, %v1044
  %v1046 = vpop.f32.mrb[0].mxu0
  %1047 = vmatprep.mubr.bf16.mxu0 0
  %1048 = vmatmul.mubr.bf16.gmra.mrb[0].mxu0 %v900
  %v1049 = vpop.f32.mrb[0].mxu0
  %v1050 = vadd.f32 0.0, %v1049
  %v1051 = vpop.f32.mrb[0].mxu0
  %v1052 = vpop.f32.mrb[0].mxu0
  %v1053 = vadd.f32 0.0, %v1052
  %v1054 = vpop.f32.mrb[0].mxu0
  %1055 = vmatprep.mubr.bf16.mxu0 0
  %1056 = vmatmul.mubr.bf16.gmra.mrb[0].mxu0 %v901
  %v1057 = vpop.f32.mrb[0].mxu0
  %v1058 = vadd.f32 0.0, %v1057
  %v1059 = vpop.f32.mrb[0].mxu0
  %v1060 = vpop.f32.mrb[0].mxu0
  %v1061 = vadd.f32 0.0, %v1060
  %v1062 = vpop.f32.mrb[0].mxu0
  %1063 = vmatprep.mubr.bf16.mxu0 0
  %1064 = vmatmul.mubr.bf16.gmra.mrb[0].mxu0 %v902
  %v1065 = vpop.f32.mrb[0].mxu0
  %v1066 = vadd.f32 0.0, %v1065
  %v1067 = vpop.f32.mrb[0].mxu0
  %v1068 = vpop.f32.mrb[0].mxu0
  %v1069 = vadd.f32 0.0, %v1068
  %v1070 = vpop.f32.mrb[0].mxu0
  %1071 = vmatprep.mubr.bf16.mxu0 0
  %1072 = vmatmul.mubr.bf16.gmra.mrb[0].mxu0 %v903
  %v1073 = vpop.f32.mrb[0].mxu0
  %v1074 = vadd.f32 0.0, %v1073
  %v1075 = vpop.f32.mrb[0].mxu0
  %v1076 = vpop.f32.mrb[0].mxu0
  %v1077 = vadd.f32 0.0, %v1076
  %v1078 = vpop.f32.mrb[0].mxu0
  %1079 = vmatprep.mubr.bf16.mxu0 0
  %1080 = vmatmul.mubr.bf16.gmra.mrb[0].mxu0 %v904
  %v1081 = vpop.f32.mrb[0].mxu0
  %v1082 = vadd.f32 0.0, %v1081
  %v1083 = vpop.f32.mrb[0].mxu0
  %v1084 = vpop.f32.mrb[0].mxu0
  %v1085 = vadd.f32 0.0, %v1084
  %v1086 = vpop.f32.mrb[0].mxu0
  %1087 = vmatprep.mubr.bf16.mxu0 0
  %1088 = vmatmul.mubr.bf16.gmra.mrb[0].mxu0 %v905
  %v1089 = vpop.f32.mrb[0].mxu0
  %v1090 = vadd.f32 0.0, %v1089
  %v1091 = vpop.f32.mrb[0].mxu0
  %v1092 = vpop.f32.mrb[0].mxu0
  %v1093 = vadd.f32 0.0, %v1092
  %v1094 = vpop.f32.mrb[0].mxu0
  %1095 = vmatprep.mubr.bf16.mxu0 0
  %1096 = vmatmul.mubr.bf16.gmra.mrb[0].mxu0 %v906
  %v1097 = vpop.f32.mrb[0].mxu0
  %v1098 = vadd.f32 0.0, %v1097
  %v1099 = vpop.f32.mrb[0].mxu0
  %v1100 = vpop.f32.mrb[0].mxu0
  %v1101 = vadd.f32 0.0, %v1100
  %v1102 = vpop.f32.mrb[0].mxu0
  %1103 = vmatprep.mubr.bf16.mxu0 0
  %1104 = vmatmul.mubr.bf16.gmra.mrb[0].mxu0 %v907
  %v1105 = vpop.f32.mrb[0].mxu0
  %v1106 = vadd.f32 0.0, %v1105
  %v1107 = vpop.f32.mrb[0].mxu0
  %v1108 = vpop.f32.mrb[0].mxu0
  %v1109 = vadd.f32 0.0, %v1108
  %v1110 = vpop.f32.mrb[0].mxu0
  %1111 = vmatprep.mubr.bf16.mxu0 0
  %1112 = vmatmul.mubr.bf16.gmra.mrb[0].mxu0 %v908
  %v1113 = vpop.f32.mrb[0].mxu0
  %v1114 = vadd.f32 0.0, %v1113
  %v1115 = vpop.f32.mrb[0].mxu0
  %v1116 = vpop.f32.mrb[0].mxu0
  %v1117 = vadd.f32 0.0, %v1116
  %v1118 = vpop.f32.mrb[0].mxu0
  %1119 = vmatprep.mubr.bf16.mxu0 0
  %1120 = vmatmul.mubr.bf16.gmra.mrb[0].mxu0 %v909
  %v1121 = vpop.f32.mrb[0].mxu0
  %v1122 = vadd.f32 0.0, %v1121
  %v1123 = vpop.f32.mrb[0].mxu0
  %v1124 = vpop.f32.mrb[0].mxu0
  %v1125 = vadd.f32 0.0, %v1124
  %v1126 = vpop.f32.mrb[0].mxu0
  %1127 = vmatprep.mubr.bf16.mxu0 0
  %1128 = vmatmul.mubr.bf16.gmra.mrb[0].mxu0 %v910
  %v1129 = vpop.f32.mrb[0].mxu0
  %v1130 = vadd.f32 0.0, %v1129
  %v1131 = vpop.f32.mrb[0].mxu0
  %v1132 = vpop.f32.mrb[0].mxu0
  %v1133 = vadd.f32 0.0, %v1132
  %v1134 = vpop.f32.mrb[0].mxu0
  %1135 = vdwg.mxu0
  %1136 = vst [vmem:[%s6] sm:$0xff] %v1010
  %1137 = vst [vmem:[%s6 + $0x8] sm:$0xff] %v1013
  %1138 = vst [vmem:[%s6 + $0x10] sm:$0xff] %v1018
  %1139 = vst [vmem:[%s6 + $0x18] sm:$0xff] %v1021
  %1140 = vst [vmem:[%s6 + $0x20] sm:$0xff] %v1026
  %1141 = vst [vmem:[%s6 + $0x28] sm:$0xff] %v1029
  %1142 = vst [vmem:[%s6 + $0x30] sm:$0xff] %v1034
  %1143 = vst [vmem:[%s6 + $0x38] sm:$0xff] %v1037
  %1144 = vst [vmem:[%s6 + $0x40] sm:$0xff] %v1042
  %1145 = vst [vmem:[%s6 + $0x48] sm:$0xff] %v1045
  %1146 = vst [vmem:[%s6 + $0x50] sm:$0xff] %v1050
  %1147 = vst [vmem:[%s6 + $0x58] sm:$0xff] %v1053
  %1148 = vst [vmem:[%s6 + $0x60] sm:$0xff] %v1058
  %1149 = vst [vmem:[%s6 + $0x68] sm:$0xff] %v1061
  %1150 = vst [vmem:[%s6 + $0x70] sm:$0xff] %v1066
  %1151 = vst [vmem:[%s6 + $0x78] sm:$0xff] %v1069
  %1152 = vst [vmem:[%s6 + $0x80] sm:$0xff] %v1074
  %1153 = vst [vmem:[%s6 + $0x88] sm:$0xff] %v1077
  %1154 = vst [vmem:[%s6 + $0x90] sm:$0xff] %v1082
  %1155 = vst [vmem:[%s6 + $0x98] sm:$0xff] %v1085
  %1156 = vst [vmem:[%s6 + $0xa0] sm:$0xff] %v1090
  %1157 = vst [vmem:[%s6 + $0xa8] sm:$0xff] %v1093
  %1158 = vst [vmem:[%s6 + $0xb0] sm:$0xff] %v1098
  %1159 = vst [vmem:[%s6 + $0xb8] sm:$0xff] %v1101
  %1160 = vst [vmem:[%s6 + $0xc0] sm:$0xff] %v1106
  %1161 = vst [vmem:[%s6 + $0xc8] sm:$0xff] %v1109
  %1162 = vst [vmem:[%s6 + $0xd0] sm:$0xff] %v1114
  %1163 = vst [vmem:[%s6 + $0xd8] sm:$0xff] %v1117
  %1164 = vst [vmem:[%s6 + $0xe0] sm:$0xff] %v1122
  %1165 = vst [vmem:[%s6 + $0xe8] sm:$0xff] %v1125
  %1166 = vst [vmem:[%s6 + $0xf0] sm:$0xff] %v1130
  %1167 = vst [vmem:[%s6 + $0xf8] sm:$0xff] %v1133
  // Predicated region
  $region26: #{pinet_forward.1} parent=0 // pred_check
    _
  $region27: #{pinet_forward.1} parent=0 // pred_check_branch
    %1169 = sbr.rel (0) target = $region29
  $region28: #{pinet_forward.1} parent=0 // pred_region
    _
  $region29: #{pinet_forward.1} parent=0 // pred_fallthru
    _
  // Predicated region
  $region30: #{pinet_forward.1} parent=0 // pred_check
    _
  $region31: #{pinet_forward.1} parent=0 // pred_check_branch
    %1171 = sbr.rel (0) target = $region33
  $region32: #{pinet_forward.1} parent=0 // pred_region
    _
  $region33: #{pinet_forward.1} parent=0 // pred_fallthru
    _

</llo_original>
